<compile_context>
chip_gen: v7x
topology: tpu7x:2x2x1
jax: 0.10.0
libtpu: 0.0.40
codegen_flags: <defaults>
</compile_context>

<pallas_src>
from functools import partial

import jax
import jax.numpy as jnp
from jax.experimental import pallas as pl
from jax.experimental.pallas import tpu as pltpu

FEATURE = 32     # feature_size
CLASSES = 8      # num_classes
MIX = 4          # num_mixture
EPS = 1e-5       # BatchNorm1d eps
_ROWS = (2 * MIX + 1) * CLASSES   # 72 fused rows: 5 gating groups + 4 expert groups


def _moe_kernel(x_ref, w_ref, b_ref, cg_ref,
                probT_ref, gatesT_ref, part_ref, *, bt, batch, padded):
    """One batch block: fused gating/expert matmul, streaming softmax+sigmoid
    mixture combine, context-gating pre-BN activations, and per-block BatchNorm
    partial sums (finalized in the wrapper -> the batch grid is 'parallel')."""
    # One fused MXU matmul, transposed so batch sits on the 128-lane axis:
    #   acts[r, b] = sum_f W_fused[r, f] * x[b, f]          -> [72, bt]
    acts = jax.lax.dot_general(
        w_ref[...], x_ref[...],
        dimension_numbers=(((1,), (1,)), ((), ())),
        preferred_element_type=jnp.float32) + b_ref[...]

    # Gating softmax over the (MIX+1) groups fused with the expert sigmoids.
    # Streaming combine: only one exp tile is live at a time and the [32,bt]
    # expert block is never materialized (fewer live [*,bt] temporaries).
    mx = acts[0:CLASSES, :]
    for m in range(1, MIX + 1):
        mx = jnp.maximum(mx, acts[m * CLASSES:(m + 1) * CLASSES, :])

    off = (MIX + 1) * CLASSES
    e0 = jnp.exp(acts[0:CLASSES, :] - mx)
    denom = e0 + jnp.exp(acts[MIX * CLASSES:(MIX + 1) * CLASSES, :] - mx)
    acc = e0 * jax.nn.sigmoid(acts[off:off + CLASSES, :])
    for m in range(1, MIX):
        e_m = jnp.exp(acts[m * CLASSES:(m + 1) * CLASSES, :] - mx)
        denom = denom + e_m
        acc = acc + e_m * jax.nn.sigmoid(
            acts[off + m * CLASSES:off + (m + 1) * CLASSES, :])
    prob = acc * pl.reciprocal(denom)          # exact (keeps the 1e-4 tolerance)
    probT_ref[...] = prob

    # ContextGating pre-BN: gates = Wcg @ prob - diag(Wcg) * prob   [C, bt].
    # Kept on the MXU: with BN now per-block the 8x8 dot is off the critical
    # path; the review's VPU-FMA alternative is marginal.
    wcg = cg_ref[:, 0:CLASSES]
    diag = cg_ref[:, CLASSES:CLASSES + 1]
    gates = jnp.dot(wcg, prob, preferred_element_type=jnp.float32) - diag * prob
    gatesT_ref[...] = gates

    # BatchNorm partial statistics for THIS block only (sum / sum-of-squares
    # over the lane axis).  Padded lanes are masked out so the wrapper can
    # divide by the real batch size.
    if padded:
        lane = jax.lax.broadcasted_iota(jnp.int32, (CLASSES, bt), 1)
        valid = (pl.program_id(0) * bt + lane) < batch
        gm = jnp.where(valid, gates, 0.0)
    else:
        gm = gates
    s = jnp.sum(gm, axis=1, keepdims=True)            # [C, 1]
    ss = jnp.sum(gm * gm, axis=1, keepdims=True)      # [C, 1]
    lane128 = jax.lax.broadcasted_iota(jnp.int32, (CLASSES, 128), 1)
    part_ref[...] = jnp.where(lane128 == 0, s, jnp.where(lane128 == 1, ss, 0.0))


def moe_forward(x, wg, bg, we, be, wcg, gamma, beta, *, b_tile=8192):
    """x: [B, F].  wg: [F, C*(M+1)], bg: [C*(M+1)], we: [F, C*M], be: [C*M],
    wcg: [C, C] (PyTorch [out, in] layout), gamma/beta: [C].  Returns [B, C]."""
    B = x.shape[0]
    F_, C, M = FEATURE, CLASSES, MIX

    # ---- batch tiling: lane-dense tiles (multiple of 128); pad the batch up to
    #      a whole number of tiles, masked lanes excluded from the BN stats.
    b_tile = max(128, (int(b_tile) // 128) * 128)
    bt = min(b_tile, ((B + 127) // 128) * 128)
    B_pad = ((B + bt - 1) // bt) * bt
    nblk = B_pad // bt
    padded = B_pad != B

    x32 = x.astype(jnp.float32)
    if padded:
        x32 = jnp.pad(x32, ((0, B_pad - B), (0, 0)))

    # ---- fuse gating + expert weights into one [72, 32] block (row m*C + c)
    wg_t = wg.reshape(F_, C, M + 1).transpose(2, 1, 0).reshape((M + 1) * C, F_)
    we_t = we.reshape(F_, C, M).transpose(2, 1, 0).reshape(M * C, F_)
    w_fused = jnp.concatenate([wg_t, we_t], axis=0).astype(jnp.float32)   # [72, 32]
    bg_t = bg.reshape(C, M + 1).T.reshape((M + 1) * C, 1)
    be_t = be.reshape(C, M).T.reshape(M * C, 1)
    b_fused = jnp.concatenate([bg_t, be_t], axis=0).astype(jnp.float32)   # [72, 1]

    # ---- pack ContextGating fc params into one small block: [Wcg | diag | 0-pad]
    cg = jnp.zeros((C, 16), jnp.float32)
    cg = cg.at[:, 0:C].set(wcg.astype(jnp.float32))
    cg = cg.at[:, C].set(jnp.diag(wcg).astype(jnp.float32))

    # VMEM budget ~1.2 KiB per batch element (double-buffered x block, [72,bt]
    # acts + temporaries, two double-buffered [8,bt] outputs).  Raise the scoped
    # limit (v5e default is 16 MiB) but stay under v7x's 64 MiB physical VMEM.
    vmem_limit = int(min(60 * 2**20, max(40 * 2**20, 2816 * bt)))

    probT, gatesT, partials = pl.pallas_call(
        partial(_moe_kernel, bt=bt, batch=B, padded=padded),
        out_shape=(
            jax.ShapeDtypeStruct((C, B_pad), jnp.float32),       # probT
            jax.ShapeDtypeStruct((C, B_pad), jnp.float32),       # gatesT (pre-BN)
            jax.ShapeDtypeStruct((nblk * C, 128), jnp.float32),  # BN partials/block
        ),
        grid=(nblk,),
        in_specs=[
            pl.BlockSpec((bt, F_), lambda j: (j, 0)),       # x batch block
            pl.BlockSpec((_ROWS, F_), lambda j: (0, 0)),    # fused weight (resident)
            pl.BlockSpec((_ROWS, 1), lambda j: (0, 0)),     # fused bias
            pl.BlockSpec((C, 16), lambda j: (0, 0)),        # packed CG params
        ],
        out_specs=(
            pl.BlockSpec((C, bt), lambda j: (0, j)),
            pl.BlockSpec((C, bt), lambda j: (0, j)),
            pl.BlockSpec((C, 128), lambda j: (j, 0)),       # lane 0: sum, lane 1: sumsq
        ),
        compiler_params=pltpu.CompilerParams(
            dimension_semantics=("parallel",),              # batch grid -> both v7x TCs
            vmem_limit_bytes=vmem_limit),
    )(x32, w_fused, b_fused, cg)

    # ---- tiny XLA epilogue: finalize BatchNorm (training mode, biased variance),
    #      fold the affine, and fuse the sigmoid gate * prob into the [C,B]->[B,C]
    #      transpose copy (no separate Pallas pass-2 HBM round trip).
    parts = partials.reshape(nblk, C, 128)
    ssum = jnp.sum(parts[:, :, 0], axis=0)                  # [C]
    ssq = jnp.sum(parts[:, :, 1], axis=0)                   # [C]
    mean = ssum / B
    var = jnp.maximum(ssq / B - mean * mean, 0.0)   # guard E[x^2]-E[x]^2 cancellation
    scale = gamma.astype(jnp.float32) * jax.lax.rsqrt(var + EPS)
    shift = beta.astype(jnp.float32) - mean * scale
    pT = probT[:, :B] if padded else probT
    gT = gatesT[:, :B] if padded else gatesT
    out = (pT * jax.nn.sigmoid(gT * scale[:, None] + shift[:, None])).T
    return out                                              # [B, C]


if __name__ == "__main__":
    key = jax.random.PRNGKey(0)
    ks = jax.random.split(key, 6)
    B = 200     # deliberately NOT a multiple of 128: exercises padding + masking

    def xavier(k, shape):
        std = (2.0 / (shape[0] + shape[1])) ** 0.5
        return (std * jax.random.normal(k, shape)).astype(jnp.float32)

    x = jax.random.normal(ks[0], (B, FEATURE), dtype=jnp.float32)
    wg = xavier(ks[1], (FEATURE, CLASSES * (MIX + 1)))    # gating_activation_fc
    bg = (0.1 * jax.random.normal(ks[2], (CLASSES * (MIX + 1),))).astype(jnp.float32)
    we = xavier(ks[3], (FEATURE, CLASSES * MIX))          # expert_activation
    be = (0.1 * jax.random.normal(ks[4], (CLASSES * MIX,))).astype(jnp.float32)
    wcg = xavier(ks[5], (CLASSES, CLASSES))               # context_gating.fc.weight
    gamma = jnp.ones((CLASSES,), jnp.float32)             # BatchNorm1d default init
    beta = jnp.zeros((CLASSES,), jnp.float32)

    out = jax.block_until_ready(
        moe_forward(x, wg, bg, we, be, wcg, gamma, beta, b_tile=128))

    # Pure-JAX reference of the same forward semantics.
    ga = x @ wg + bg
    gd = jax.nn.softmax(ga.reshape(-1, MIX + 1), axis=-1)
    ea = x @ we + be
    ed = jax.nn.sigmoid(ea.reshape(-1, MIX))
    prob = jnp.sum(gd[:, :MIX] * ed, axis=1).reshape(-1, CLASSES)
    gates = prob @ wcg.T - prob * jnp.diag(wcg)
    mean = gates.mean(0, keepdims=True)
    var = ((gates - mean) ** 2).mean(0, keepdims=True)
    gates = (gates - mean) / jnp.sqrt(var + EPS) * gamma + beta
    ref = prob * jax.nn.sigmoid(gates)

    assert out.shape == (B, CLASSES)
    assert jnp.allclose(out, ref, atol=1e-4, rtol=1e-4), (
        float(jnp.max(jnp.abs(out - ref))))
    print("KERNEL_OK")
</pallas_src>

<mosaic_0001>
module attributes {stable_mosaic.version = 11 : i64} {
  func.func @_moe_kernel(%arg0: i32, %arg1: memref<128x32xf32, #tpu.memory_space<vmem>>, %arg2: memref<72x32xf32, #tpu.memory_space<vmem>>, %arg3: memref<72x1xf32, #tpu.memory_space<vmem>>, %arg4: memref<8x16xf32, #tpu.memory_space<vmem>>, %arg5: memref<8x128xf32, #tpu.memory_space<vmem>>, %arg6: memref<8x128xf32, #tpu.memory_space<vmem>>, %arg7: memref<8x128xf32, #tpu.memory_space<vmem>>) attributes {dimension_semantics = [#tpu.dimension_semantics<parallel>], iteration_bounds = array<i64: 2>, scalar_prefetch = 0 : i64, scratch_operands = 0 : i64, tpu.core_type = #tpu.core_type<tc>, window_params = [{transform_indices = @transform_0, window_bounds = array<i64: 128, 32>}, {pipeline_mode = #tpu.pipeline_mode<synchronous>, transform_indices = @transform_1, window_bounds = array<i64: 72, 32>}, {pipeline_mode = #tpu.pipeline_mode<synchronous>, transform_indices = @transform_2, window_bounds = array<i64: 72, 1>}, {pipeline_mode = #tpu.pipeline_mode<synchronous>, transform_indices = @transform_3, window_bounds = array<i64: 8, 16>}, {transform_indices = @transform_4, window_bounds = array<i64: 8, 128>}, {transform_indices = @transform_5, window_bounds = array<i64: 8, 128>}, {transform_indices = @transform_6, window_bounds = array<i64: 8, 128>}]} {
    %c0 = arith.constant 0 : index
    %c0_0 = arith.constant 0 : index
    %0 = vector.load %arg2[%c0, %c0_0] : memref<72x32xf32, #tpu.memory_space<vmem>>, vector<72x32xf32>
    %c0_1 = arith.constant 0 : index
    %c0_2 = arith.constant 0 : index
    %1 = vector.load %arg1[%c0_1, %c0_2] : memref<128x32xf32, #tpu.memory_space<vmem>>, vector<128x32xf32>
    %cst = arith.constant dense<0.000000e+00> : vector<72x128xf32>
    %2 = tpu.matmul %0, %1, %cst {dimension_numbers = #tpu.dot_dimension_numbers<[1], [1], [0], [0], [0, 0, 1, 0], [], []>} : vector<72x32xf32>, vector<128x32xf32>, vector<72x128xf32> -> vector<72x128xf32>
    %c0_3 = arith.constant 0 : index
    %c0_4 = arith.constant 0 : index
    %3 = vector.load %arg3[%c0_3, %c0_4] : memref<72x1xf32, #tpu.memory_space<vmem>>, vector<72x1xf32>
    %4 = vector.broadcast %3 : vector<72x1xf32> to vector<72x128xf32>
    %5 = arith.addf %2, %4 : vector<72x128xf32>
    %6 = vector.extract_strided_slice %5 {offsets = [0, 0], sizes = [8, 128], strides = [1, 1]} : vector<72x128xf32> to vector<8x128xf32>
    %7 = vector.extract_strided_slice %5 {offsets = [8, 0], sizes = [8, 128], strides = [1, 1]} : vector<72x128xf32> to vector<8x128xf32>
    %8 = arith.maximumf %6, %7 : vector<8x128xf32>
    %9 = vector.extract_strided_slice %5 {offsets = [16, 0], sizes = [8, 128], strides = [1, 1]} : vector<72x128xf32> to vector<8x128xf32>
    %10 = arith.maximumf %8, %9 : vector<8x128xf32>
    %11 = vector.extract_strided_slice %5 {offsets = [24, 0], sizes = [8, 128], strides = [1, 1]} : vector<72x128xf32> to vector<8x128xf32>
    %12 = arith.maximumf %10, %11 : vector<8x128xf32>
    %13 = vector.extract_strided_slice %5 {offsets = [32, 0], sizes = [8, 128], strides = [1, 1]} : vector<72x128xf32> to vector<8x128xf32>
    %14 = arith.maximumf %12, %13 : vector<8x128xf32>
    %15 = vector.extract_strided_slice %5 {offsets = [0, 0], sizes = [8, 128], strides = [1, 1]} : vector<72x128xf32> to vector<8x128xf32>
    %16 = arith.subf %15, %14 : vector<8x128xf32>
    %17 = math.exp %16 : vector<8x128xf32>
    %18 = vector.extract_strided_slice %5 {offsets = [32, 0], sizes = [8, 128], strides = [1, 1]} : vector<72x128xf32> to vector<8x128xf32>
    %19 = arith.subf %18, %14 : vector<8x128xf32>
    %20 = math.exp %19 : vector<8x128xf32>
    %21 = arith.addf %17, %20 : vector<8x128xf32>
    %22 = vector.extract_strided_slice %5 {offsets = [40, 0], sizes = [8, 128], strides = [1, 1]} : vector<72x128xf32> to vector<8x128xf32>
    %23 = arith.negf %22 : vector<8x128xf32>
    %24 = math.exp %23 : vector<8x128xf32>
    %cst_5 = arith.constant 1.000000e+00 : f32
    %25 = vector.broadcast %cst_5 : f32 to vector<8x128xf32>
    %26 = arith.addf %25, %24 : vector<8x128xf32>
    %27 = arith.divf %25, %26 : vector<8x128xf32>
    %28 = arith.mulf %17, %27 : vector<8x128xf32>
    %29 = vector.extract_strided_slice %5 {offsets = [8, 0], sizes = [8, 128], strides = [1, 1]} : vector<72x128xf32> to vector<8x128xf32>
    %30 = arith.subf %29, %14 : vector<8x128xf32>
    %31 = math.exp %30 : vector<8x128xf32>
    %32 = arith.addf %21, %31 : vector<8x128xf32>
    %33 = vector.extract_strided_slice %5 {offsets = [48, 0], sizes = [8, 128], strides = [1, 1]} : vector<72x128xf32> to vector<8x128xf32>
    %34 = arith.negf %33 : vector<8x128xf32>
    %35 = math.exp %34 : vector<8x128xf32>
    %cst_6 = arith.constant 1.000000e+00 : f32
    %36 = vector.broadcast %cst_6 : f32 to vector<8x128xf32>
    %37 = arith.addf %36, %35 : vector<8x128xf32>
    %38 = arith.divf %36, %37 : vector<8x128xf32>
    %39 = arith.mulf %31, %38 : vector<8x128xf32>
    %40 = arith.addf %28, %39 : vector<8x128xf32>
    %41 = vector.extract_strided_slice %5 {offsets = [16, 0], sizes = [8, 128], strides = [1, 1]} : vector<72x128xf32> to vector<8x128xf32>
    %42 = arith.subf %41, %14 : vector<8x128xf32>
    %43 = math.exp %42 : vector<8x128xf32>
    %44 = arith.addf %32, %43 : vector<8x128xf32>
    %45 = vector.extract_strided_slice %5 {offsets = [56, 0], sizes = [8, 128], strides = [1, 1]} : vector<72x128xf32> to vector<8x128xf32>
    %46 = arith.negf %45 : vector<8x128xf32>
    %47 = math.exp %46 : vector<8x128xf32>
    %cst_7 = arith.constant 1.000000e+00 : f32
    %48 = vector.broadcast %cst_7 : f32 to vector<8x128xf32>
    %49 = arith.addf %48, %47 : vector<8x128xf32>
    %50 = arith.divf %48, %49 : vector<8x128xf32>
    %51 = arith.mulf %43, %50 : vector<8x128xf32>
    %52 = arith.addf %40, %51 : vector<8x128xf32>
    %53 = vector.extract_strided_slice %5 {offsets = [24, 0], sizes = [8, 128], strides = [1, 1]} : vector<72x128xf32> to vector<8x128xf32>
    %54 = arith.subf %53, %14 : vector<8x128xf32>
    %55 = math.exp %54 : vector<8x128xf32>
    %56 = arith.addf %44, %55 : vector<8x128xf32>
    %57 = vector.extract_strided_slice %5 {offsets = [64, 0], sizes = [8, 128], strides = [1, 1]} : vector<72x128xf32> to vector<8x128xf32>
    %58 = arith.negf %57 : vector<8x128xf32>
    %59 = math.exp %58 : vector<8x128xf32>
    %cst_8 = arith.constant 1.000000e+00 : f32
    %60 = vector.broadcast %cst_8 : f32 to vector<8x128xf32>
    %61 = arith.addf %60, %59 : vector<8x128xf32>
    %62 = arith.divf %60, %61 : vector<8x128xf32>
    %63 = arith.mulf %55, %62 : vector<8x128xf32>
    %64 = arith.addf %52, %63 : vector<8x128xf32>
    %65 = tpu.reciprocal %56 : vector<8x128xf32> -> vector<8x128xf32>
    %66 = arith.mulf %64, %65 : vector<8x128xf32>
    %c0_9 = arith.constant 0 : index
    %c0_10 = arith.constant 0 : index
    %67 = vector.load %arg5[%c0_9, %c0_10] : memref<8x128xf32, #tpu.memory_space<vmem>>, vector<8x128xf32>
    tpu.vector_store %arg5[%c0_9, %c0_10], %66 {strides = array<i32>} : memref<8x128xf32, #tpu.memory_space<vmem>>, vector<8x128xf32>,
    %c0_11 = arith.constant 0 : index
    %c0_12 = arith.constant 0 : index
    %68 = vector.load %arg4[%c0_11, %c0_12] : memref<8x16xf32, #tpu.memory_space<vmem>>, vector<8x8xf32>
    %c0_13 = arith.constant 0 : index
    %c8 = arith.constant 8 : index
    %69 = vector.load %arg4[%c0_13, %c8] : memref<8x16xf32, #tpu.memory_space<vmem>>, vector<8x1xf32>
    %cst_14 = arith.constant dense<0.000000e+00> : vector<8x128xf32>
    %70 = tpu.matmul %68, %66, %cst_14 {dimension_numbers = #tpu.dot_dimension_numbers<[1], [0], [0], [1], [0, 0, 1, 1], [], []>} : vector<8x8xf32>, vector<8x128xf32>, vector<8x128xf32> -> vector<8x128xf32>
    %71 = vector.broadcast %69 : vector<8x1xf32> to vector<8x128xf32>
    %72 = arith.mulf %71, %66 : vector<8x128xf32>
    %73 = arith.subf %70, %72 : vector<8x128xf32>
    %c0_15 = arith.constant 0 : index
    %c0_16 = arith.constant 0 : index
    %74 = vector.load %arg6[%c0_15, %c0_16] : memref<8x128xf32, #tpu.memory_space<vmem>>, vector<8x128xf32>
    tpu.vector_store %arg6[%c0_15, %c0_16], %73 {strides = array<i32>} : memref<8x128xf32, #tpu.memory_space<vmem>>, vector<8x128xf32>,
    %75 = tpu.iota {dimensions = array<i32: 1>} : vector<8x128xi32>
    %c128_i32 = arith.constant 128 : i32
    %76 = arith.muli %arg0, %c128_i32 : i32
    %77 = vector.broadcast %76 : i32 to vector<8x128xi32>
    %78 = arith.addi %77, %75 : vector<8x128xi32>
    %c200_i32 = arith.constant 200 : i32
    %79 = vector.broadcast %c200_i32 : i32 to vector<8x128xi32>
    %80 = arith.cmpi slt, %78, %79 : vector<8x128xi32>
    %cst_17 = arith.constant 0.000000e+00 : f32
    %81 = vector.broadcast %cst_17 : f32 to vector<8x128xf32>
    %82 = arith.select %80, %73, %81 : vector<8x128xi1>, vector<8x128xf32>
    %cst_18 = arith.constant dense<0.000000e+00> : vector<8xf32>
    %83 = vector.multi_reduction <add>, %82, %cst_18 [1] : vector<8x128xf32> to vector<8xf32>
    %84 = vector.shape_cast %83 : vector<8xf32> to vector<8x1xf32>
    %85 = arith.mulf %82, %82 : vector<8x128xf32>
    %cst_19 = arith.constant dense<0.000000e+00> : vector<8xf32>
    %86 = vector.multi_reduction <add>, %85, %cst_19 [1] : vector<8x128xf32> to vector<8xf32>
    %87 = vector.shape_cast %86 : vector<8xf32> to vector<8x1xf32>
    %88 = tpu.iota {dimensions = array<i32: 1>} : vector<8x128xi32>
    %c0_i32 = arith.constant 0 : i32
    %89 = vector.broadcast %c0_i32 : i32 to vector<8x128xi32>
    %90 = arith.cmpi eq, %88, %89 : vector<8x128xi32>
    %c1_i32 = arith.constant 1 : i32
    %91 = vector.broadcast %c1_i32 : i32 to vector<8x128xi32>
    %92 = arith.cmpi eq, %88, %91 : vector<8x128xi32>
    %cst_20 = arith.constant 0.000000e+00 : f32
    %93 = vector.shape_cast %87 : vector<8x1xf32> to vector<8x1xf32>
    %94 = vector.broadcast %93 : vector<8x1xf32> to vector<8x128xf32>
    %95 = vector.broadcast %cst_20 : f32 to vector<8x128xf32>
    %96 = arith.select %92, %94, %95 : vector<8x128xi1>, vector<8x128xf32>
    %97 = vector.shape_cast %84 : vector<8x1xf32> to vector<8x1xf32>
    %98 = vector.broadcast %97 : vector<8x1xf32> to vector<8x128xf32>
    %99 = arith.select %90, %98, %96 : vector<8x128xi1>, vector<8x128xf32>
    %c0_21 = arith.constant 0 : index
    %c0_22 = arith.constant 0 : index
    %100 = vector.load %arg7[%c0_21, %c0_22] : memref<8x128xf32, #tpu.memory_space<vmem>>, vector<8x128xf32>
    tpu.vector_store %arg7[%c0_21, %c0_22], %99 {strides = array<i32>} : memref<8x128xf32, #tpu.memory_space<vmem>>, vector<8x128xf32>,
    return
  }
  func.func @transform_0(%arg0: i32) -> (i32, i32) {
    %c0_i32 = arith.constant 0 : i32
    %c0_i32_0 = arith.constant 0 : i32
    return %arg0, %c0_i32 : i32, i32
  }
  func.func @transform_1(%arg0: i32) -> (i32, i32) {
    %c0_i32 = arith.constant 0 : i32
    %c0_i32_0 = arith.constant 0 : i32
    %c0_i32_1 = arith.constant 0 : i32
    return %c0_i32, %c0_i32_0 : i32, i32
  }
  func.func @transform_2(%arg0: i32) -> (i32, i32) {
    %c0_i32 = arith.constant 0 : i32
    %c0_i32_0 = arith.constant 0 : i32
    %c0_i32_1 = arith.constant 0 : i32
    return %c0_i32, %c0_i32_0 : i32, i32
  }
  func.func @transform_3(%arg0: i32) -> (i32, i32) {
    %c0_i32 = arith.constant 0 : i32
    %c0_i32_0 = arith.constant 0 : i32
    %c0_i32_1 = arith.constant 0 : i32
    return %c0_i32, %c0_i32_0 : i32, i32
  }
  func.func @transform_4(%arg0: i32) -> (i32, i32) {
    %c0_i32 = arith.constant 0 : i32
    %c0_i32_0 = arith.constant 0 : i32
    return %c0_i32, %arg0 : i32, i32
  }
  func.func @transform_5(%arg0: i32) -> (i32, i32) {
    %c0_i32 = arith.constant 0 : i32
    %c0_i32_0 = arith.constant 0 : i32
    return %c0_i32, %arg0 : i32, i32
  }
  func.func @transform_6(%arg0: i32) -> (i32, i32) {
    %c0_i32 = arith.constant 0 : i32
    %c0_i32_0 = arith.constant 0 : i32
    return %arg0, %c0_i32 : i32, i32
  }
}

</mosaic_0001>

<llo_original>
// kernel: tpu_custom_call.1
$region0: #{tpu_custom_call.1}
  #allocation0 [shape = 'u32[]', space=smem, size = 0x4, offset = 0x4, fixed_abs, tag = 'smem constant byte address 0x4 - core index']
  #allocation1 [shape = 'u32[144,128]{1,0:T(1,128)}', space=vmem, size = 0x12000, scoped, tag = 'internal scratch']
  %s0 = inlined_call_operand.vmem [shape: f32[256,32], index: 0, kind: input, shape index: {}]
  %s1 = inlined_call_operand.vmem [shape: f32[72,32], index: 1, kind: input, shape index: {}]
  %s2 = inlined_call_operand.vmem [shape: f32[72,1], index: 2, kind: input, shape index: {}]
  %s3 = inlined_call_operand.vmem [shape: f32[8,16], index: 3, kind: input, shape index: {}]
  %s4 = inlined_call_operand.hbm [shape: f32[8,256], index: 4, kind: output, shape index: {0}]
  %s5 = inlined_call_operand.hbm [shape: f32[8,256], index: 5, kind: output, shape index: {1}]
  %s6 = inlined_call_operand.hbm [shape: f32[16,128], index: 6, kind: output, shape index: {2}]
  %7 = xla_tuple %s4, %s5, %s6
  %s8 = sld [smem:[#allocation0]]
  $region65: #{tpu_custom_call.1} parent=0
    _
  %s10 = ssub.s32 1, %s8
  %s11 = scalar_select 0, %s10, %s8
  $region1: #{tpu_custom_call.1} parent=0
    #allocation2 [shape = 'u8[8192]{0}', space=vmem, size = 0x2000, scoped, tag = 'output window, operand 0']
    #allocation3 [shape = 's32[2]{0}', space=sflag, size = 0x8, scoped, tag = 'scoped memory for tpu_custom_call.1']
    #allocation4 [shape = 'u8[8192]{0}', space=vmem, size = 0x2000, scoped, tag = 'output window, operand 1']
    #allocation5 [shape = 's32[2]{0}', space=sflag, size = 0x8, scoped, tag = 'scoped memory for tpu_custom_call.1']
    #allocation6 [shape = 'u8[8192]{0}', space=vmem, size = 0x2000, scoped, tag = 'output window, operand 2']
    %12 = vsyncpa [#allocation3], 0
    %s13 = scalar_lea.sflag [#allocation3], 1
    %14 = vsyncpa %s13, 0
    %15 = vsyncpa [#allocation5], 0
    %s16 = scalar_lea.sflag [#allocation5], 1
    %17 = vsyncpa %s16, 0
    loop: start=0, step=1, limit=4
    $region2: #{tpu_custom_call.1} parent=1 // loop_pre_header
      _
    $region3: #{tpu_custom_call.1} parent=1 // loop_header
      %s19 = sphi 0, %s23
      %p20 = scmp.ge.s32.totalorder %s19, 4
      %s29 = sphi 0, %s31
      %s32 = sphi 0, %s29
      %s33 = sphi 0, %s32
      %s49 = sphi 0, %s33
      %s53 = sphi 0, %s53
      %s55 = sphi 0, %s53
      %s56 = sphi 0, %s55
      %s70 = sphi 0, %s56
      %s74 = sphi 0, %s74
      %s76 = sphi 0, %s74
      %s77 = sphi 0, %s76
      %s91 = sphi 0, %s77
      %s95 = sphi 0, %s95
      %s97 = sphi 0, %s95
      %s98 = sphi 0, %s97
      %s112 = sphi 0, %s98
      %s118 = sphi 0, %s120
      %s121 = sphi 0, %s118
      %s122 = sphi 0, %s121
      %s138 = sphi 0, %s122
      %s144 = sphi 0, %s146
      %s147 = sphi 0, %s144
      %s148 = sphi 0, %s147
      %s164 = sphi 0, %s148
      %s170 = sphi 0, %s172
      %s173 = sphi 0, %s170
      %s174 = sphi 0, %s173
      %s190 = sphi 0, %s174
    $region4: #{tpu_custom_call.1} parent=1 // loop_header_branch
      %22 = sbr.rel (%p20) target = $region8
    $region5: #{tpu_custom_call.1} parent=1 // loop_body
      %s24 = ssub.s32 %s19, 1
      %s25 = ssub.s32 %s19, 2
      %s26 = sadd.s32 %s19, 1
      %s27 = ssub.s32 %s19, %s26
      %p28 = scmp.eq.s32.totalorder %s27, 0
      %s30 = sadd.s32 %s29, 1
      %s31 = scalar_select %p28, %s29, %s30
      %p34 = pneg %p28
      %p35 = scmp.eq.s32.totalorder %s19, 1
      %p36 = por %p34, %p35
      %p37 = scmp.ne.s32.totalorder %s29, %s32
      %p38 = scmp.eq.s32.totalorder %s19, 0
      %p39 = por %p37, %p38
      %p40 = scmp.ne.s32.totalorder %s29, %s32
      %p41 = scmp.eq.s32.totalorder %s24, 1
      %p42 = por %p40, %p41
      %p43 = scmp.ne.s32.totalorder %s32, %s33
      %p44 = scmp.eq.s32.totalorder %s24, 0
      %p45 = por %p43, %p44
      %p46 = scmp.ne.s32.totalorder %s32, %s33
      %p47 = scmp.eq.s32.totalorder %s25, 1
      %p48 = por %p46, %p47
      %p50 = scmp.ne.s32.totalorder %s33, %s49
      %p51 = scmp.eq.s32.totalorder %s25, 0
      %p52 = por %p50, %p51
      %s54 = sadd.s32 %s53, 1
      %p57 = scmp.eq.s32.totalorder %s19, 1
      %p58 = scmp.ne.s32.totalorder %s53, %s55
      %p59 = scmp.eq.s32.totalorder %s19, 0
      %p60 = por %p58, %p59
      %p61 = scmp.ne.s32.totalorder %s53, %s55
      %p62 = scmp.eq.s32.totalorder %s24, 1
      %p63 = por %p61, %p62
      %p64 = scmp.ne.s32.totalorder %s55, %s56
      %p65 = scmp.eq.s32.totalorder %s24, 0
      %p66 = por %p64, %p65
      %p67 = scmp.ne.s32.totalorder %s55, %s56
      %p68 = scmp.eq.s32.totalorder %s25, 1
      %p69 = por %p67, %p68
      %p71 = scmp.ne.s32.totalorder %s56, %s70
      %p72 = scmp.eq.s32.totalorder %s25, 0
      %p73 = por %p71, %p72
      %s75 = sadd.s32 %s74, 1
      %p78 = scmp.eq.s32.totalorder %s19, 1
      %p79 = scmp.ne.s32.totalorder %s74, %s76
      %p80 = scmp.eq.s32.totalorder %s19, 0
      %p81 = por %p79, %p80
      %p82 = scmp.ne.s32.totalorder %s74, %s76
      %p83 = scmp.eq.s32.totalorder %s24, 1
      %p84 = por %p82, %p83
      %p85 = scmp.ne.s32.totalorder %s76, %s77
      %p86 = scmp.eq.s32.totalorder %s24, 0
      %p87 = por %p85, %p86
      %p88 = scmp.ne.s32.totalorder %s76, %s77
      %p89 = scmp.eq.s32.totalorder %s25, 1
      %p90 = por %p88, %p89
      %p92 = scmp.ne.s32.totalorder %s77, %s91
      %p93 = scmp.eq.s32.totalorder %s25, 0
      %p94 = por %p92, %p93
      %s96 = sadd.s32 %s95, 1
      %p99 = scmp.eq.s32.totalorder %s19, 1
      %p100 = scmp.ne.s32.totalorder %s95, %s97
      %p101 = scmp.eq.s32.totalorder %s19, 0
      %p102 = por %p100, %p101
      %p103 = scmp.ne.s32.totalorder %s95, %s97
      %p104 = scmp.eq.s32.totalorder %s24, 1
      %p105 = por %p103, %p104
      %p106 = scmp.ne.s32.totalorder %s97, %s98
      %p107 = scmp.eq.s32.totalorder %s24, 0
      %p108 = por %p106, %p107
      %p109 = scmp.ne.s32.totalorder %s97, %s98
      %p110 = scmp.eq.s32.totalorder %s25, 1
      %p111 = por %p109, %p110
      %p113 = scmp.ne.s32.totalorder %s98, %s112
      %p114 = scmp.eq.s32.totalorder %s25, 0
      %p115 = por %p113, %p114
      %s116 = ssub.s32 %s19, %s26
      %p117 = scmp.eq.s32.totalorder %s116, 0
      %s119 = sadd.s32 %s118, 1
      %s120 = scalar_select %p117, %s118, %s119
      %p123 = pneg %p117
      %p124 = scmp.eq.s32.totalorder %s19, 1
      %p125 = por %p123, %p124
      %p126 = scmp.ne.s32.totalorder %s118, %s121
      %p127 = scmp.eq.s32.totalorder %s19, 0
      %p128 = por %p126, %p127
      %p129 = scmp.ne.s32.totalorder %s118, %s121
      %p130 = scmp.eq.s32.totalorder %s24, 1
      %p131 = por %p129, %p130
      %p132 = scmp.ne.s32.totalorder %s121, %s122
      %p133 = scmp.eq.s32.totalorder %s24, 0
      %p134 = por %p132, %p133
      %p135 = scmp.ne.s32.totalorder %s121, %s122
      %p136 = scmp.eq.s32.totalorder %s25, 1
      %p137 = por %p135, %p136
      %p139 = scmp.ne.s32.totalorder %s122, %s138
      %p140 = scmp.eq.s32.totalorder %s25, 0
      %p141 = por %p139, %p140
      %s142 = ssub.s32 %s19, %s26
      %p143 = scmp.eq.s32.totalorder %s142, 0
      %s145 = sadd.s32 %s144, 1
      %s146 = scalar_select %p143, %s144, %s145
      %p149 = pneg %p143
      %p150 = scmp.eq.s32.totalorder %s19, 1
      %p151 = por %p149, %p150
      %p152 = scmp.ne.s32.totalorder %s144, %s147
      %p153 = scmp.eq.s32.totalorder %s19, 0
      %p154 = por %p152, %p153
      %p155 = scmp.ne.s32.totalorder %s144, %s147
      %p156 = scmp.eq.s32.totalorder %s24, 1
      %p157 = por %p155, %p156
      %p158 = scmp.ne.s32.totalorder %s147, %s148
      %p159 = scmp.eq.s32.totalorder %s24, 0
      %p160 = por %p158, %p159
      %p161 = scmp.ne.s32.totalorder %s147, %s148
      %p162 = scmp.eq.s32.totalorder %s25, 1
      %p163 = por %p161, %p162
      %p165 = scmp.ne.s32.totalorder %s148, %s164
      %p166 = scmp.eq.s32.totalorder %s25, 0
      %p167 = por %p165, %p166
      %s168 = ssub.s32 %s19, %s26
      %p169 = scmp.eq.s32.totalorder %s168, 0
      %s171 = sadd.s32 %s170, 1
      %s172 = scalar_select %p169, %s170, %s171
      %p175 = pneg %p169
      %p176 = scmp.eq.s32.totalorder %s19, 1
      %p177 = por %p175, %p176
      %p178 = scmp.ne.s32.totalorder %s170, %s173
      %p179 = scmp.eq.s32.totalorder %s19, 0
      %p180 = por %p178, %p179
      %p181 = scmp.ne.s32.totalorder %s170, %s173
      %p182 = scmp.eq.s32.totalorder %s24, 1
      %p183 = por %p181, %p182
      %p184 = scmp.ne.s32.totalorder %s173, %s174
      %p185 = scmp.eq.s32.totalorder %s24, 0
      %p186 = por %p184, %p185
      %p187 = scmp.ne.s32.totalorder %s173, %s174
      %p188 = scmp.eq.s32.totalorder %s25, 1
      %p189 = por %p187, %p188
      %p191 = scmp.ne.s32.totalorder %s174, %s190
      %p192 = scmp.eq.s32.totalorder %s25, 0
      %p193 = por %p191, %p192
      %p194 = scmp.le.s32.totalorder 1, %s19
      %p195 = scmp.lt.s32.totalorder %s19, 3
      %p196 = pnand %p194, %p195
      %p197 = pneg %p196
      // Predicated region
      $region9: #{tpu_custom_call.1} parent=5 // pred_check
        _
      $region10: #{tpu_custom_call.1} parent=5 // pred_check_branch
        %199 = sbr.rel (%p196) target = $region12
      $region11: #{tpu_custom_call.1} parent=5 // pred_region
        %s200 = ssub.s32 %s19, 1
        // Predicated region
        $region13: #{tpu_custom_call.1} parent=11 // pred_check
          %p201 = pneg %p66
        $region14: #{tpu_custom_call.1} parent=11 // pred_check_branch
          %203 = sbr.rel (%p201) target = $region16
        $region15: #{tpu_custom_call.1} parent=11 // pred_region
          _
        $region16: #{tpu_custom_call.1} parent=11 // pred_fallthru
          _
        // Predicated region
        $region17: #{tpu_custom_call.1} parent=11 // pred_check
          %p204 = pneg %p87
        $region18: #{tpu_custom_call.1} parent=11 // pred_check_branch
          %206 = sbr.rel (%p204) target = $region20
        $region19: #{tpu_custom_call.1} parent=11 // pred_region
          _
        $region20: #{tpu_custom_call.1} parent=11 // pred_fallthru
          _
        // Predicated region
        $region21: #{tpu_custom_call.1} parent=11 // pred_check
          %p207 = pneg %p108
        $region22: #{tpu_custom_call.1} parent=11 // pred_check_branch
          %209 = sbr.rel (%p207) target = $region24
        $region23: #{tpu_custom_call.1} parent=11 // pred_region
          _
        $region24: #{tpu_custom_call.1} parent=11 // pred_fallthru
          _
      $region12: #{tpu_custom_call.1} parent=5 // pred_fallthru
        _
      %p210 = scmp.lt.s32.totalorder %s19, 2
      // Predicated region
      $region25: #{tpu_custom_call.1} parent=5 // pred_check
        %p211 = pneg %p210
      $region26: #{tpu_custom_call.1} parent=5 // pred_check_branch
        %213 = sbr.rel (%p211) target = $region28
      $region27: #{tpu_custom_call.1} parent=5 // pred_region
        // Predicated region
        $region29: #{tpu_custom_call.1} parent=27 // pred_check
          %p214 = pneg %p39
        $region30: #{tpu_custom_call.1} parent=27 // pred_check_branch
          %216 = sbr.rel (%p214) target = $region32
        $region31: #{tpu_custom_call.1} parent=27 // pred_region
          %s217 = smul.u32 16, %s19
          %p218 = scmp.lt.s32.totalorder %s217, 31
          %s219 = scalar_select %p218, %s217, 31
          %s220 = smul.addr %s219, 8
          %s221 = scalar_lea.vmem %s0, %s220
          %s222 = smul.u32 16, %s19
        $region32: #{tpu_custom_call.1} parent=27 // pred_fallthru
          _
      $region28: #{tpu_custom_call.1} parent=5 // pred_fallthru
        _
      %p223 = scmp.le.s32.totalorder 1, %s19
      %p224 = scmp.lt.s32.totalorder %s19, 3
      %p225 = pnand %p223, %p224
      %p226 = pneg %p225
      // Predicated region
      $region33: #{tpu_custom_call.1} parent=5 // pred_check
        _
      $region34: #{tpu_custom_call.1} parent=5 // pred_check_branch
        %228 = sbr.rel (%p225) target = $region36
      $region35: #{tpu_custom_call.1} parent=5 // pred_region
        %s229 = ssub.s32 %s19, 1
        %s230 = smul.u32 16, %s24
        %p231 = scmp.lt.s32.totalorder %s230, 31
        %s232 = scalar_select %p231, %s230, 31
        %s233 = smul.addr %s232, 8
        %s234 = scalar_lea.vmem %s0, %s233
        %p235 = pneg %p45
        %p236 = pneg %p42
        %p237 = pneg %p66
        %p238 = pneg %p63
        %p239 = pneg %p87
        %p240 = pneg %p84
        %p241 = pneg %p108
        %p242 = pneg %p105
        %p243 = pneg %p134
        %p244 = pneg %p131
        %s245 = sand.u32 %s121, 1
        %s246 = scalar_lea.sflag [#allocation3], %s245
        %s247 = sand.u32 %s121, 1
        %s248 = smul.addr %s247, 8
        %s249 = scalar_lea.vmem [#allocation2], %s248
        %p250 = pneg %p160
        %p251 = pneg %p157
        %s252 = sand.u32 %s24, 1
        %s253 = scalar_lea.sflag [#allocation5], %s252
        %s254 = sand.u32 %s147, 1
        %s255 = smul.addr %s254, 8
        %s256 = scalar_lea.vmem [#allocation4], %s255
        %p257 = pneg %p186
        %p258 = pneg %p183
        %s259 = sand.u32 %s24, 1
        %s260 = scalar_lea.sflag [#allocation5], %s259
        %s261 = sand.u32 %s173, 1
        %s262 = smul.addr %s261, 8
        %s263 = scalar_lea.vmem [#allocation6], %s262
        %s264 = smul.u32 16, %s24
        %p265 = scmp.lt.s32.totalorder %s264, 31
        %s266 = scalar_select %p265, %s264, 31
        %s267 = smul.addr %s266, 8
        %s268 = scalar_lea.vmem %s0, %s267
        %s269 = smul.u32 16, %s24
        %v270 = vld [vmem:[%s1] sm:$0xff]
        %v271 = vld [vmem:[%s1 + $0x8] sm:$0xff]
        %v272 = vld [vmem:[%s1 + $0x10] sm:$0xff]
        %v273 = vld [vmem:[%s1 + $0x18] sm:$0xff]
        %v274 = vld [vmem:[%s1 + $0x20] sm:$0xff]
        %v275 = vld [vmem:[%s1 + $0x28] sm:$0xff]
        %v276 = vld [vmem:[%s1 + $0x30] sm:$0xff]
        %v277 = vld [vmem:[%s1 + $0x38] sm:$0xff]
        %v278 = vld [vmem:[%s1 + $0x40] sm:$0xff]
        %v279 = vld [vmem:[%s268] sm:$0xff]
        %v280 = vld [vmem:[%s268 + $0x8] sm:$0xff]
        %v281 = vld [vmem:[%s268 + $0x10] sm:$0xff]
        %v282 = vld [vmem:[%s268 + $0x18] sm:$0xff]
        %v283 = vld [vmem:[%s268 + $0x20] sm:$0xff]
        %v284 = vld [vmem:[%s268 + $0x28] sm:$0xff]
        %v285 = vld [vmem:[%s268 + $0x30] sm:$0xff]
        %v286 = vld [vmem:[%s268 + $0x38] sm:$0xff]
        %v287 = vld [vmem:[%s268 + $0x40] sm:$0xff]
        %v288 = vld [vmem:[%s268 + $0x48] sm:$0xff]
        %v289 = vld [vmem:[%s268 + $0x50] sm:$0xff]
        %v290 = vld [vmem:[%s268 + $0x58] sm:$0xff]
        %v291 = vld [vmem:[%s268 + $0x60] sm:$0xff]
        %v292 = vld [vmem:[%s268 + $0x68] sm:$0xff]
        %v293 = vld [vmem:[%s268 + $0x70] sm:$0xff]
        %v294 = vld [vmem:[%s268 + $0x78] sm:$0xff]
        %v295 = vld [vmem:[%s2] sm:$0xff]
        %v296 = vld [vmem:[%s2 + $0x8] sm:$0xff]
        %v297 = vld [vmem:[%s2 + $0x10] sm:$0xff]
        %v298 = vld [vmem:[%s2 + $0x18] sm:$0xff]
        %v299 = vld [vmem:[%s2 + $0x20] sm:$0xff]
        %v300 = vld [vmem:[%s2 + $0x28] sm:$0xff]
        %v301 = vld [vmem:[%s2 + $0x30] sm:$0xff]
        %v302 = vld [vmem:[%s2 + $0x38] sm:$0xff]
        %v303 = vld [vmem:[%s2 + $0x40] sm:$0xff]
        %305 = vset.pattern.permute.xlu0 0
        %306 = vperm.xlu0 %305, %v295
        %v307 = vpop.permute.xlu0 %306
        %310 = vset.pattern.permute.xlu0 0
        %311 = vperm.xlu0 %310, %v296
        %v312 = vpop.permute.xlu0 %311
        %315 = vset.pattern.permute.xlu0 0
        %316 = vperm.xlu0 %315, %v297
        %v317 = vpop.permute.xlu0 %316
        %320 = vset.pattern.permute.xlu0 0
        %321 = vperm.xlu0 %320, %v298
        %v322 = vpop.permute.xlu0 %321
        %325 = vset.pattern.permute.xlu0 0
        %326 = vperm.xlu0 %325, %v299
        %v327 = vpop.permute.xlu0 %326
        %330 = vset.pattern.permute.xlu0 0
        %331 = vperm.xlu0 %330, %v300
        %v332 = vpop.permute.xlu0 %331
        %335 = vset.pattern.permute.xlu0 0
        %336 = vperm.xlu0 %335, %v301
        %v337 = vpop.permute.xlu0 %336
        %340 = vset.pattern.permute.xlu0 0
        %341 = vperm.xlu0 %340, %v302
        %v342 = vpop.permute.xlu0 %341
        %345 = vset.pattern.permute.xlu0 0
        %346 = vperm.xlu0 %345, %v303
        %v347 = vpop.permute.xlu0 %346
        %vm349 = vcmask 261120
        %v351 = vsel %vm349, %v270, 0
        %v354 = vsel %vm349, %v271, 0
        %v357 = vsel %vm349, %v272, 0
        %v360 = vsel %vm349, %v273, 0
        %v363 = vsel %vm349, %v274, 0
        %v366 = vsel %vm349, %v275, 0
        %v369 = vsel %vm349, %v276, 0
        %v372 = vsel %vm349, %v277, 0
        %v375 = vsel %vm349, %v278, 0
        %v378 = vsel %vm349, %v279, 0
        %v381 = vsel %vm349, %v280, 0
        %v384 = vsel %vm349, %v281, 0
        %v387 = vsel %vm349, %v282, 0
        %v390 = vsel %vm349, %v283, 0
        %v393 = vsel %vm349, %v284, 0
        %v396 = vsel %vm349, %v285, 0
        %v399 = vsel %vm349, %v286, 0
        %v402 = vsel %vm349, %v287, 0
        %v405 = vsel %vm349, %v288, 0
        %v408 = vsel %vm349, %v289, 0
        %v411 = vsel %vm349, %v290, 0
        %v414 = vsel %vm349, %v291, 0
        %v417 = vsel %vm349, %v292, 0
        %v420 = vsel %vm349, %v293, 0
        %v423 = vsel %vm349, %v294, 0
        %425 = vmatprep.subr.mxu0 0.0
        %426 = vmatpush1.xpose.msra.mxu0 %v378
        %427 = vmatprep.subr.mxu0 0.0
        %428 = vmatpush1.xpose.msra.mxu0 %v381
        %429 = vmatprep.subr.mxu0 0.0
        %430 = vmatpush1.xpose.msra.mxu0 %v384
        %431 = vmatprep.subr.mxu0 0.0
        %432 = vmatpush1.xpose.msra.mxu0 %v387
        %433 = vmatprep.subr.mxu0 0.0
        %434 = vmatpush1.xpose.msra.mxu0 %v390
        %435 = vmatprep.subr.mxu0 0.0
        %436 = vmatpush1.xpose.msra.mxu0 %v393
        %437 = vmatprep.subr.mxu0 0.0
        %438 = vmatpush1.xpose.msra.mxu0 %v396
        %439 = vmatprep.subr.mxu0 0.0
        %440 = vmatpush1.xpose.msra.mxu0 %v399
        %441 = vmatprep.subr.mxu0 0.0
        %442 = vmatpush1.xpose.msra.mxu0 %v402
        %443 = vmatprep.subr.mxu0 0.0
        %444 = vmatpush1.xpose.msra.mxu0 %v405
        %445 = vmatprep.subr.mxu0 0.0
        %446 = vmatpush1.xpose.msra.mxu0 %v408
        %447 = vmatprep.subr.mxu0 0.0
        %448 = vmatpush1.xpose.msra.mxu0 %v411
        %449 = vmatprep.subr.mxu0 0.0
        %450 = vmatpush1.xpose.msra.mxu0 %v414
        %451 = vmatprep.subr.mxu0 0.0
        %452 = vmatpush1.xpose.msra.mxu0 %v417
        %453 = vmatprep.subr.mxu0 0.0
        %454 = vmatpush1.xpose.msra.mxu0 %v420
        %455 = vmatprep.subr.mxu0 0.0
        %456 = vmatpush1.xpose.msra.mxu0 %v423
        %457 = vmatprep.subr.mxu0 0.0
        %458 = vmatpush1.xpose.msra.mxu0 0.0
        %459 = vmatprep.subr.mxu0 0.0
        %460 = vmatpush1.xpose.msra.mxu0 0.0
        %461 = vmatprep.subr.mxu0 0.0
        %462 = vmatpush1.xpose.msra.mxu0 0.0
        %463 = vmatprep.subr.mxu0 0.0
        %464 = vmatpush1.xpose.msra.mxu0 0.0
        %465 = vmatprep.subr.mxu0 0.0
        %466 = vmatpush1.xpose.msra.mxu0 0.0
        %467 = vmatprep.subr.mxu0 0.0
        %468 = vmatpush1.xpose.msra.mxu0 0.0
        %469 = vmatprep.subr.mxu0 0.0
        %470 = vmatpush1.xpose.msra.mxu0 0.0
        %471 = vmatprep.subr.mxu0 0.0
        %472 = vmatpush1.xpose.msra.mxu0 0.0
        %473 = vmatprep.subr.mxu0 0.0
        %474 = vmatpush1.xpose.msra.mxu0 0.0
        %475 = vmatprep.subr.mxu0 0.0
        %476 = vmatpush1.xpose.msra.mxu0 0.0
        %477 = vmatprep.subr.mxu0 0.0
        %478 = vmatpush1.xpose.msra.mxu0 0.0
        %479 = vmatprep.subr.mxu0 0.0
        %480 = vmatpush1.xpose.msra.mxu0 0.0
        %481 = vmatprep.subr.mxu0 0.0
        %482 = vmatpush1.xpose.msra.mxu0 0.0
        %483 = vmatprep.subr.mxu0 0.0
        %484 = vmatpush1.xpose.msra.mxu0 0.0
        %485 = vmatprep.subr.mxu0 0.0
        %486 = vmatpush1.xpose.msra.mxu0 0.0
        %487 = vmatprep.subr.mxu0 0.0
        %488 = vmatpush1.xpose.msra.mxu0 0.0
        %489 = vmatprep.mubr.f32.mxu0 0.0
        %490 = vmatmul.mubr.f32.gmra.mrb[0].mxu0 %v351
        %v491 = vpop.f32.mrb[0].mxu0
        %v492 = vadd.f32 %v307, %v491
        %v493 = vpop.f32.mrb[0].mxu0
        %494 = vmatprep.mubr.f32.mxu0 0.0
        %495 = vmatmul.mubr.f32.gmra.mrb[0].mxu0 %v354
        %v496 = vpop.f32.mrb[0].mxu0
        %v497 = vadd.f32 %v312, %v496
        %v498 = vpop.f32.mrb[0].mxu0
        %499 = vmatprep.mubr.f32.mxu0 0.0
        %500 = vmatmul.mubr.f32.gmra.mrb[0].mxu0 %v357
        %v501 = vpop.f32.mrb[0].mxu0
        %v502 = vadd.f32 %v317, %v501
        %v503 = vpop.f32.mrb[0].mxu0
        %504 = vmatprep.mubr.f32.mxu0 0.0
        %505 = vmatmul.mubr.f32.gmra.mrb[0].mxu0 %v360
        %v506 = vpop.f32.mrb[0].mxu0
        %v507 = vadd.f32 %v322, %v506
        %v508 = vpop.f32.mrb[0].mxu0
        %509 = vmatprep.mubr.f32.mxu0 0.0
        %510 = vmatmul.mubr.f32.gmra.mrb[0].mxu0 %v363
        %v511 = vpop.f32.mrb[0].mxu0
        %v512 = vadd.f32 %v327, %v511
        %v513 = vpop.f32.mrb[0].mxu0
        %514 = vmatprep.mubr.f32.mxu0 0.0
        %515 = vmatmul.mubr.f32.gmra.mrb[0].mxu0 %v366
        %v516 = vpop.f32.mrb[0].mxu0
        %v517 = vadd.f32 %v332, %v516
        %v518 = vpop.f32.mrb[0].mxu0
        %519 = vmatprep.mubr.f32.mxu0 0.0
        %520 = vmatmul.mubr.f32.gmra.mrb[0].mxu0 %v369
        %v521 = vpop.f32.mrb[0].mxu0
        %v522 = vadd.f32 %v337, %v521
        %v523 = vpop.f32.mrb[0].mxu0
        %524 = vmatprep.mubr.f32.mxu0 0.0
        %525 = vmatmul.mubr.f32.gmra.mrb[0].mxu0 %v372
        %v526 = vpop.f32.mrb[0].mxu0
        %v527 = vadd.f32 %v342, %v526
        %v528 = vpop.f32.mrb[0].mxu0
        %529 = vmatprep.mubr.f32.mxu0 0.0
        %530 = vmatmul.mubr.f32.gmra.mrb[0].mxu0 %v375
        %v531 = vpop.f32.mrb[0].mxu0
        %v532 = vadd.f32 %v347, %v531
        %v533 = vpop.f32.mrb[0].mxu0
        %534 = vdwg.mxu0
        %v535 = vmax.f32 %v492, %v497
        %v536 = vmax.f32 %v535, %v502
        %v537 = vmax.f32 %v536, %v507
        %v538 = vmax.f32 %v537, %v512
        %v539 = vsub.f32 %v492, %v538
        %v540 = vmul.f32 %v539, 1.442695
        %v541 = vpow.pop %v540
        %v542 = vsub.f32 %v512, %v538
        %v543 = vmul.f32 %v542, 1.442695
        %v544 = vpow.pop %v543
        %v545 = vadd.f32 %v541, %v544
        %v546 = vxor.u32 %v517, 2147483648
        %v547 = vmul.f32 %v546, 1.442695
        %v548 = vpow.pop %v547
        %v549 = vadd.f32 %v548, 1.0
        %v550 = vrcp.pop %v549
        %v551 = vmul.f32 1.0, %v550
        %v552 = vmul.f32 %v541, %v551
        %v553 = vsub.f32 %v497, %v538
        %v554 = vmul.f32 %v553, 1.442695
        %v555 = vpow.pop %v554
        %v556 = vadd.f32 %v545, %v555
        %v557 = vxor.u32 %v522, 2147483648
        %v558 = vmul.f32 %v557, 1.442695
        %v559 = vpow.pop %v558
        %v560 = vadd.f32 %v559, 1.0
        %v561 = vrcp.pop %v560
        %v562 = vmul.f32 1.0, %v561
        %v563 = vmul.f32 %v555, %v562
        %v564 = vadd.f32 %v552, %v563
        %v565 = vsub.f32 %v502, %v538
        %v566 = vmul.f32 %v565, 1.442695
        %v567 = vpow.pop %v566
        %v568 = vadd.f32 %v556, %v567
        %v569 = vxor.u32 %v527, 2147483648
        %v570 = vmul.f32 %v569, 1.442695
        %v571 = vpow.pop %v570
        %v572 = vadd.f32 %v571, 1.0
        %v573 = vrcp.pop %v572
        %v574 = vmul.f32 1.0, %v573
        %v575 = vmul.f32 %v567, %v574
        %v576 = vadd.f32 %v564, %v575
        %v577 = vsub.f32 %v507, %v538
        %v578 = vmul.f32 %v577, 1.442695
        %v579 = vpow.pop %v578
        %v580 = vadd.f32 %v568, %v579
        %v581 = vxor.u32 %v532, 2147483648
        %v582 = vmul.f32 %v581, 1.442695
        %v583 = vpow.pop %v582
        %v584 = vadd.f32 %v583, 1.0
        %v585 = vrcp.pop %v584
        %v586 = vmul.f32 1.0, %v585
        %v587 = vmul.f32 %v579, %v586
        %v588 = vadd.f32 %v576, %v587
        %v589 = vrcp.pop %v580
        %v590 = vmul.f32 %v588, %v589
        %591 = vst [vmem:[%s249] sm:$0xff] %v590
        %v592 = vld [vmem:[%s3] sm:$0xff]
        %vm593 = vcmask 64512
        %v595 = vsel %vm593, %v592, 0
        %597 = vmatprep.subr.mxu0 0.0
        %598 = vmatpush1.msra.mxu0 %v590
        %599 = vmatprep.subr.mxu0 0.0
        %600 = vmatpush1.msra.mxu0 0.0
        %601 = vmatprep.subr.mxu0 0.0
        %602 = vmatpush1.msra.mxu0 0.0
        %603 = vmatprep.subr.mxu0 0.0
        %604 = vmatpush1.msra.mxu0 0.0
        %605 = vmatprep.subr.mxu0 0.0
        %606 = vmatpush1.msra.mxu0 0.0
        %607 = vmatprep.subr.mxu0 0.0
        %608 = vmatpush1.msra.mxu0 0.0
        %609 = vmatprep.subr.mxu0 0.0
        %610 = vmatpush1.msra.mxu0 0.0
        %611 = vmatprep.subr.mxu0 0.0
        %612 = vmatpush1.msra.mxu0 0.0
        %613 = vmatprep.subr.mxu0 0.0
        %614 = vmatpush1.msra.mxu0 0.0
        %615 = vmatprep.subr.mxu0 0.0
        %616 = vmatpush1.msra.mxu0 0.0
        %617 = vmatprep.subr.mxu0 0.0
        %618 = vmatpush1.msra.mxu0 0.0
        %619 = vmatprep.subr.mxu0 0.0
        %620 = vmatpush1.msra.mxu0 0.0
        %621 = vmatprep.subr.mxu0 0.0
        %622 = vmatpush1.msra.mxu0 0.0
        %623 = vmatprep.subr.mxu0 0.0
        %624 = vmatpush1.msra.mxu0 0.0
        %625 = vmatprep.subr.mxu0 0.0
        %626 = vmatpush1.msra.mxu0 0.0
        %627 = vmatprep.subr.mxu0 0.0
        %628 = vmatpush1.msra.mxu0 0.0
        %629 = vmatprep.subr.mxu0 0.0
        %630 = vmatpush1.msra.mxu0 0.0
        %631 = vmatprep.subr.mxu0 0.0
        %632 = vmatpush1.msra.mxu0 0.0
        %633 = vmatprep.subr.mxu0 0.0
        %634 = vmatpush1.msra.mxu0 0.0
        %635 = vmatprep.subr.mxu0 0.0
        %636 = vmatpush1.msra.mxu0 0.0
        %637 = vmatprep.subr.mxu0 0.0
        %638 = vmatpush1.msra.mxu0 0.0
        %639 = vmatprep.subr.mxu0 0.0
        %640 = vmatpush1.msra.mxu0 0.0
        %641 = vmatprep.subr.mxu0 0.0
        %642 = vmatpush1.msra.mxu0 0.0
        %643 = vmatprep.subr.mxu0 0.0
        %644 = vmatpush1.msra.mxu0 0.0
        %645 = vmatprep.subr.mxu0 0.0
        %646 = vmatpush1.msra.mxu0 0.0
        %647 = vmatprep.subr.mxu0 0.0
        %648 = vmatpush1.msra.mxu0 0.0
        %649 = vmatprep.subr.mxu0 0.0
        %650 = vmatpush1.msra.mxu0 0.0
        %651 = vmatprep.subr.mxu0 0.0
        %652 = vmatpush1.msra.mxu0 0.0
        %653 = vmatprep.subr.mxu0 0.0
        %654 = vmatpush1.msra.mxu0 0.0
        %655 = vmatprep.subr.mxu0 0.0
        %656 = vmatpush1.msra.mxu0 0.0
        %657 = vmatprep.subr.mxu0 0.0
        %658 = vmatpush1.msra.mxu0 0.0
        %659 = vmatprep.subr.mxu0 0.0
        %660 = vmatpush1.msra.mxu0 0.0
        %661 = vmatprep.mubr.f32.mxu0 0.0
        %662 = vmatmul.mubr.f32.gmra.mrb[0].mxu0 %v595
        %v663 = vpop.f32.mrb[0].mxu0
        %v664 = vadd.f32 0.0, %v663
        %v665 = vpop.f32.mrb[0].mxu0
        %666 = vdwg.mxu0
        %667 = vset.pattern.permute.xlu0 8
        %668 = vperm.xlu0 %667, %v592
        %v669 = vpop.permute.xlu0 %668
        %v671 = vmul.f32 %v669, %v590
        %v672 = vsub.f32 %v664, %v671
        %673 = vst [vmem:[%s256] sm:$0xff] %v672
        %v674 = vlaneseq
        %v675 = vand.u32 %v674, 127
        %s676 = smul.u32 %s24, 128
        %v677 = vstv %s676
        %v678 = vadd.s32 %v677, %v675
        %vm679 = vcmp.lt.s32.totalorder %v678, 200
        %v680 = vsel %vm679, %v672, 0.0
        %681 = vadd.xlane.f32.xlu0 %v680
        %v682 = vpop.xlane.xlu0 %681
        %v683 = vmul.f32 %v680, %v680
        %684 = vadd.xlane.f32.xlu0 %v683
        %v685 = vpop.xlane.xlu0 %684
        %vm686 = vcmp.eq.s32.totalorder %v675, 0
        %vm687 = vcmp.eq.s32.totalorder %v675, 1
        %v688 = vsel %vm687, %v685, 0.0
        %v689 = vsel %vm686, %v682, %v688
        %690 = vst [vmem:[%s263] sm:$0xff] %v689
        %s691 = sand.u32 %s121, 1
        %s692 = scalar_lea.sflag [#allocation3], %s691
        %s693 = sand.u32 %s121, 1
        %s694 = smul.addr %s693, 8
        %s695 = scalar_lea.vmem [#allocation2], %s694
        %s696 = sand.u32 %s24, 1
        %s697 = scalar_lea.sflag [#allocation5], %s696
        %s698 = sand.u32 %s147, 1
        %s699 = smul.addr %s698, 8
        %s700 = scalar_lea.vmem [#allocation4], %s699
        %s701 = sand.u32 %s24, 1
        %s702 = scalar_lea.sflag [#allocation5], %s701
        %s703 = sand.u32 %s173, 1
        %s704 = smul.addr %s703, 8
        %s705 = scalar_lea.vmem [#allocation6], %s704
        // Predicated region
        $region37: #{tpu_custom_call.1} parent=35 // pred_check
          %p706 = pneg %p131
        $region38: #{tpu_custom_call.1} parent=35 // pred_check_branch
          %708 = sbr.rel (%p706) target = $region40
        $region39: #{tpu_custom_call.1} parent=35 // pred_region
          %s710 = ssub.s32 128, 128
          %711 = vsyncadd %s692, %s710
          %s712 = smul.addr %s24, 128
          %s713 = scalar_lea.hbm %s4, %s712
          %s715 = sshll.u32 %s695, 4
          %s716 = int_to_ptr.vmem [resolvable:$true] %s715
          %718 = dma.vmem_to_hbm [thread:$0]  %s716, 128, %s713, %s692
        $region40: #{tpu_custom_call.1} parent=35 // pred_fallthru
          _
        // Predicated region
        $region41: #{tpu_custom_call.1} parent=35 // pred_check
          %p719 = pneg %p157
        $region42: #{tpu_custom_call.1} parent=35 // pred_check_branch
          %721 = sbr.rel (%p719) target = $region44
        $region43: #{tpu_custom_call.1} parent=35 // pred_region
          %s723 = ssub.s32 128, 128
          %724 = vsyncadd %s697, %s723
          %s725 = smul.addr %s24, 128
          %s726 = scalar_lea.hbm %s5, %s725
          %s728 = sshll.u32 %s700, 4
          %s729 = int_to_ptr.vmem [resolvable:$true] %s728
          %731 = dma.vmem_to_hbm [thread:$0]  %s729, 128, %s726, %s697
        $region44: #{tpu_custom_call.1} parent=35 // pred_fallthru
          _
        // Predicated region
        $region45: #{tpu_custom_call.1} parent=35 // pred_check
          %p732 = pneg %p183
        $region46: #{tpu_custom_call.1} parent=35 // pred_check_branch
          %734 = sbr.rel (%p732) target = $region48
        $region47: #{tpu_custom_call.1} parent=35 // pred_region
          %s736 = ssub.s32 128, 128
          %737 = vsyncadd %s702, %s736
          %s738 = smul.addr %s24, 128
          %s739 = scalar_lea.hbm %s6, %s738
          %s741 = sshll.u32 %s705, 4
          %s742 = int_to_ptr.vmem [resolvable:$true] %s741
          %744 = dma.vmem_to_hbm [thread:$0]  %s742, 128, %s739, %s702
        $region48: #{tpu_custom_call.1} parent=35 // pred_fallthru
          _
      $region36: #{tpu_custom_call.1} parent=5 // pred_fallthru
        _
      %p745 = scmp.le.s32.totalorder 2, %s19
      // Predicated region
      $region49: #{tpu_custom_call.1} parent=5 // pred_check
        %p746 = pneg %p745
      $region50: #{tpu_custom_call.1} parent=5 // pred_check_branch
        %748 = sbr.rel (%p746) target = $region52
      $region51: #{tpu_custom_call.1} parent=5 // pred_region
        %s749 = ssub.s32 %s19, 2
        // Predicated region
        $region53: #{tpu_custom_call.1} parent=51 // pred_check
          %p750 = pneg %p137
        $region54: #{tpu_custom_call.1} parent=51 // pred_check_branch
          %752 = sbr.rel (%p750) target = $region56
        $region55: #{tpu_custom_call.1} parent=51 // pred_region
          %s753 = sand.u32 %s122, 1
          %s754 = scalar_lea.sflag [#allocation3], %s753
          %s755 = sand.u32 %s122, 1
          %s756 = smul.addr %s755, 8
          %s757 = scalar_lea.vmem [#allocation2], %s756
          %758 = dma.done %s754, 128
        $region56: #{tpu_custom_call.1} parent=51 // pred_fallthru
          _
        // Predicated region
        $region57: #{tpu_custom_call.1} parent=51 // pred_check
          %p759 = pneg %p163
        $region58: #{tpu_custom_call.1} parent=51 // pred_check_branch
          %761 = sbr.rel (%p759) target = $region60
        $region59: #{tpu_custom_call.1} parent=51 // pred_region
          %s762 = sand.u32 %s25, 1
          %s763 = scalar_lea.sflag [#allocation5], %s762
          %s764 = sand.u32 %s148, 1
          %s765 = smul.addr %s764, 8
          %s766 = scalar_lea.vmem [#allocation4], %s765
          %767 = dma.done %s763, 128
        $region60: #{tpu_custom_call.1} parent=51 // pred_fallthru
          _
        // Predicated region
        $region61: #{tpu_custom_call.1} parent=51 // pred_check
          %p768 = pneg %p189
        $region62: #{tpu_custom_call.1} parent=51 // pred_check_branch
          %770 = sbr.rel (%p768) target = $region64
        $region63: #{tpu_custom_call.1} parent=51 // pred_region
          %s771 = sand.u32 %s25, 1
          %s772 = scalar_lea.sflag [#allocation5], %s771
          %s773 = sand.u32 %s174, 1
          %s774 = smul.addr %s773, 8
          %s775 = scalar_lea.vmem [#allocation6], %s774
          %776 = dma.done %s772, 128
        $region64: #{tpu_custom_call.1} parent=51 // pred_fallthru
          _
      $region52: #{tpu_custom_call.1} parent=5 // pred_fallthru
        _
    $region6: #{tpu_custom_call.1} parent=1 // loop_footer
      %s23 = sadd.s32 1, %s19
    $region7: #{tpu_custom_call.1} parent=1 // loop_footer_branch
      %18 = sbr.rel target = $region3
    $region8: #{tpu_custom_call.1} parent=1 // loop_exit
      _
    %777 = vsyncpa [#allocation3], 1
    %s778 = scalar_lea.sflag [#allocation3], 1
    %779 = vsyncpa %s778, 1
    %780 = vsyncpa [#allocation5], 1
    %s781 = scalar_lea.sflag [#allocation5], 1
    %782 = vsyncpa %s781, 1

</llo_original>
